<compile_context>
chip_gen: v7x
topology: tpu7x:2x2x1
jax: 0.10.0
libtpu: 0.0.40
codegen_flags: <defaults>
</compile_context>

<pallas_src>
import functools
from itertools import permutations

import jax
import jax.numpy as jnp
import numpy as np
from jax.experimental import pallas as pl
from jax.experimental.pallas import tpu as pltpu

EPSILON = 1e-6
LOG_SIG_MIN = -20.0
LOG_SIG_MAX = 2.0

_MAX_BATCH_TILE = 2048          # VMEM-safe cap for a single batch tile
_VMEM_LIMIT_BYTES = 64 * 1024 * 1024   # within v7x physical (64 MiB); plenty on v5e/v6e


def _round_up(x, m):
    return ((x + m - 1) // m) * m


def _auto_batch_tile(batch):
    """Pick (tile, n_tiles): one step if it fits, else an even number of steps
    (balanced across v7x's two TensorCores), each tile a multiple of 8 sublanes."""
    b8 = _round_up(max(batch, 8), 8)
    if b8 <= _MAX_BATCH_TILE:
        return b8, 1
    half = _round_up(pl.cdiv(b8, 2), 8)
    if half <= _MAX_BATCH_TILE:
        return half, 2
    n = pl.cdiv(b8, _MAX_BATCH_TILE)
    n = 2 * pl.cdiv(n, 2)                      # even grid length for megacore balance
    return _round_up(pl.cdiv(b8, n), 8), n


def _gnn_actor_kernel(
    obs_body_ref,                # (tb, dim_body)
    oe_ref,                      # (N, tb, dim_object + dim_edge)  lane-packed [obj, agg]
    w1b_ref, w1oe_ref, b1_ref,   # phi layer 1 (split-weight form of the concat)
    w2_ref, b2_ref,              # phi layer 2
    rw1_ref, rb1_ref,            # rho layer 1
    rw2_ref, rb2_ref,            # rho layer 2
    wh_ref, bh_ref,              # fused [mean | log_std] head: (256, 2A), (1, 2A)
    heads_ref,                   # (tb, 2A)  fused output
    *,
    nb_objects, readout, act_dim,
):
    N = nb_objects
    tb = obs_body_ref.shape[0]
    hidden = b1_ref.shape[-1]
    dphi = b2_ref.shape[-1]

    def mm(a, b):
        # Weights arrive pre-cast (host-side) when bf16 is requested; only the
        # activation operand is cast here.  Always accumulate in f32 on the MXU.
        if b.dtype == jnp.bfloat16 and a.dtype != jnp.bfloat16:
            a = a.astype(jnp.bfloat16)
        return jnp.dot(a, b, preferred_element_type=jnp.float32)

    obs_body = obs_body_ref[...]                   # (tb, dim_body)
    oe = oe_ref[...]                               # (N, tb, dObj+dEdge)

    # shared-across-objects term (bias folded in once, hoisted out of the object dim)
    base = mm(obs_body, w1b_ref[...]) + b1_ref[...]                     # (tb, 256) f32

    # fold the object dimension into matmul M
    oe2 = oe.reshape(N * tb, oe.shape[-1])                              # (N*tb, dObj+dEdge)
    pre1 = mm(oe2, w1oe_ref[...]).reshape(N, tb, hidden) + base[None]   # broadcast shared term
    h1 = jnp.maximum(pre1, 0.0).reshape(N * tb, hidden)

    phi = jnp.maximum(mm(h1, w2_ref[...]) + b2_ref[...], 0.0)
    phi = phi.reshape(N, tb, dphi)

    # readout reduction over the object axis
    if readout == 'sum':
        x = phi.sum(axis=0)
    elif readout == 'mean':
        x = phi.sum(axis=0) * (1.0 / N)
    elif readout == 'max':
        x = phi.max(axis=0)
    else:
        raise NotImplementedError(readout)

    # rho_actor trunk + fused heads
    h = jnp.maximum(mm(x, rw1_ref[...]) + rb1_ref[...], 0.0)
    h = jnp.maximum(mm(h, rw2_ref[...]) + rb2_ref[...], 0.0)
    heads = mm(h, wh_ref[...]) + bh_ref[...]                            # (tb, 2A) f32

    # clamp only the log_std lanes (lane >= act_dim); single fused store
    lane = jax.lax.broadcasted_iota(jnp.int32, heads.shape, 1)
    clamped = jnp.clip(heads, LOG_SIG_MIN, LOG_SIG_MAX)
    heads_ref[...] = jnp.where(lane >= act_dim, clamped, heads)


def gnn_actor_forward(obs, edge_features, params, *, nb_objects, dim_body, dim_object,
                      incoming_edges, aggregation='max', readout='sum',
                      batch_tile=None, use_bf16=False):
    """Pallas implementation of GnnActor.forward -> (mean, log_std)."""
    B = obs.shape[0]
    N = nb_objects
    A = params['bm'].shape[-1]
    dim_edge = edge_features.shape[-1]
    hidden = params['b1'].shape[-1]
    dphi = params['b2'].shape[-1]

    for e in incoming_edges:
        assert len(e) > 0, "every object must have at least one incoming edge"

    # ---------- host-side layout prep (cheap XLA ops) ----------
    obs_body = obs[:, :dim_body]                                        # (B, dim_body)
    obs_obj = obs[:, dim_body:dim_body + N * dim_object]
    obs_obj = jnp.transpose(obs_obj.reshape(B, N, dim_object), (1, 0, 2))   # (N, B, dObj)

    # per-object incoming-edge aggregation (tiny VPU reduce; lane-packed for the kernel)
    aggs = []
    for i in range(N):
        ef = edge_features[np.asarray(incoming_edges[i])]               # (n_in, B, dE)
        if aggregation == 'max':
            aggs.append(ef.max(axis=0))
        elif aggregation == 'sum':
            aggs.append(ef.sum(axis=0))
        elif aggregation == 'mean':
            aggs.append(ef.mean(axis=0))
        else:
            raise NotImplementedError(aggregation)
    agg = jnp.stack(aggs)                                               # (N, B, dE)

    oe = jnp.concatenate([obs_obj, agg], axis=-1)                       # (N, B, dObj+dEdge)
    doe = dim_object + dim_edge

    # ---------- batch tiling (overhead-aware; balanced even grid for v7x megacore) ----------
    if batch_tile is None:
        tb, n_tiles = _auto_batch_tile(B)
    else:
        tb = _round_up(min(int(batch_tile), _round_up(max(B, 8), 8)), 8)
        n_tiles = pl.cdiv(_round_up(max(B, 8), 8), tb)
    B_pad = tb * n_tiles
    if B_pad != B:
        obs_body = jnp.pad(obs_body, ((0, B_pad - B), (0, 0)))
        oe = jnp.pad(oe, ((0, 0), (0, B_pad - B), (0, 0)))
    grid = (n_tiles,)

    # ---------- split / fuse weights on host ----------
    w1 = params['w1']
    w1b = w1[:dim_body]                                                 # (dim_body, 256)
    w1oe = w1[dim_body:]                                                # (dObj+dEdge, 256)
    wh = jnp.concatenate([params['wm'], params['ws']], axis=-1)         # (256, 2A)
    bh = jnp.concatenate([params['bm'], params['bs']], axis=-1)         # (1, 2A)

    if use_bf16:
        # pre-cast matmul operands once on the host (no per-step in-kernel weight casts,
        # half the weight/activation DMA); biases stay f32, accumulation stays f32.
        cast = lambda a: a.astype(jnp.bfloat16)
        obs_body, oe = cast(obs_body), cast(oe)
        w1b, w1oe = cast(w1b), cast(w1oe)
        w2, rw1, rw2, wh = cast(params['w2']), cast(params['rw1']), cast(params['rw2']), cast(wh)
    else:
        w2, rw1, rw2 = params['w2'], params['rw1'], params['rw2']

    kernel = functools.partial(
        _gnn_actor_kernel,
        nb_objects=N, readout=readout, act_dim=A,
    )

    def resident(arr):
        # Constant index_map => weight block stays VMEM-resident across the batch grid.
        zeros = (0,) * arr.ndim
        return pl.BlockSpec(arr.shape, lambda i, _z=zeros: _z)

    flat_inputs = (
        obs_body, oe,
        w1b, w1oe, params['b1'],
        w2, params['b2'],
        rw1, params['rb1'],
        rw2, params['rb2'],
        wh, bh,
    )
    in_specs = [
        pl.BlockSpec((tb, dim_body), lambda i: (i, 0)),
        pl.BlockSpec((N, tb, doe), lambda i: (0, i, 0)),
    ] + [resident(a) for a in flat_inputs[2:]]

    out_specs = pl.BlockSpec((tb, 2 * A), lambda i: (i, 0))
    out_shape = jax.ShapeDtypeStruct((B_pad, 2 * A), jnp.float32)

    flops = 2 * B_pad * (
        dim_body * hidden
        + N * (doe * hidden + hidden * dphi)
        + dphi * hidden + hidden * hidden + hidden * 2 * A
    )
    bytes_accessed = (sum(int(np.prod(a.shape)) * a.dtype.itemsize for a in flat_inputs)
                      + 4 * B_pad * 2 * A)

    heads = pl.pallas_call(
        kernel,
        out_shape=out_shape,
        grid=grid,
        in_specs=in_specs,
        out_specs=out_specs,
        compiler_params=pltpu.CompilerParams(
            dimension_semantics=("parallel",),
            vmem_limit_bytes=_VMEM_LIMIT_BYTES,
        ),
        cost_estimate=pl.CostEstimate(flops=int(flops), transcendentals=0,
                                      bytes_accessed=int(bytes_accessed)),
    )(*flat_inputs)

    return heads[:B, :A], heads[:B, A:]


def reference_forward(obs, edge_features, params, *, nb_objects, dim_body, dim_object,
                      incoming_edges, aggregation='max', readout='sum'):
    """Pure-JAX reference mirroring the PyTorch forward exactly."""
    obs_body = obs[:, :dim_body]
    inps = []
    for i in range(nb_objects):
        obj = obs[:, dim_body + dim_object * i: dim_body + dim_object * (i + 1)]
        ef = edge_features[np.asarray(incoming_edges[i])]
        if aggregation == 'max':
            agg = ef.max(axis=0)
        elif aggregation == 'sum':
            agg = ef.sum(axis=0)
        else:
            agg = ef.mean(axis=0)
        inps.append(jnp.concatenate([obs_body, obj, agg], axis=1))
    inp = jnp.stack(inps)                                               # (N, B, Din)
    h = jax.nn.relu(inp @ params['w1'] + params['b1'])
    phi = jax.nn.relu(h @ params['w2'] + params['b2'])
    if readout == 'sum':
        x = phi.sum(axis=0)
    elif readout == 'mean':
        x = phi.mean(axis=0)
    else:
        x = phi.max(axis=0)
    h = jax.nn.relu(x @ params['rw1'] + params['rb1'])
    h = jax.nn.relu(h @ params['rw2'] + params['rb2'])
    mean = h @ params['wm'] + params['bm']
    logstd = jnp.clip(h @ params['ws'] + params['bs'], LOG_SIG_MIN, LOG_SIG_MAX)
    return mean, logstd


def _linear_init(key, fan_in, fan_out):
    # PyTorch nn.Linear default: U(-1/sqrt(fan_in), 1/sqrt(fan_in)) for W and b.
    kw, kb = jax.random.split(key)
    bound = 1.0 / np.sqrt(fan_in)
    w = jax.random.uniform(kw, (fan_in, fan_out), jnp.float32, -bound, bound)
    b = jax.random.uniform(kb, (1, fan_out), jnp.float32, -bound, bound)
    return w, b


if __name__ == "__main__":
    # --- configuration consistent with the module ---
    nb_objects = 3
    dim_body = 10
    dim_object = 15
    dim_edge = 6
    hidden_phi = 256
    dim_phi_actor_input = dim_body + dim_object + dim_edge       # 31
    dim_phi_actor_output = 64
    dim_rho_actor_input = dim_phi_actor_output
    dim_rho_actor_output = 4

    # directed edges between objects; incoming_edges[i] = edge ids pointing INTO object i
    edges = list(permutations(range(nb_objects), 2))             # 6 edges
    incoming_edges = [[e for e, (_, dst) in enumerate(edges) if dst == i]
                      for i in range(nb_objects)]

    key = jax.random.PRNGKey(0)
    k_data, k1, k2, k3, k4, k5, k6 = jax.random.split(key, 7)

    w1, b1 = _linear_init(k1, dim_phi_actor_input, hidden_phi)
    w2, b2 = _linear_init(k2, hidden_phi, dim_phi_actor_output)
    rw1, rb1 = _linear_init(k3, dim_rho_actor_input, 256)
    rw2, rb2 = _linear_init(k4, 256, 256)
    wm, bm = _linear_init(k5, 256, dim_rho_actor_output)
    ws, bs = _linear_init(k6, 256, dim_rho_actor_output)
    params = dict(w1=w1, b1=b1, w2=w2, b2=b2, rw1=rw1, rb1=rb1, rw2=rw2, rb2=rb2,
                  wm=wm, bm=bm, ws=ws, bs=bs)

    test_cases = [
        # auto tiling: single grid step (grid=(1,))
        dict(batch=2,    aggregation='max',  readout='sum',  use_bf16=False, tol=1e-5),
        dict(batch=2,    aggregation='sum',  readout='max',  use_bf16=False, tol=1e-5),
        dict(batch=300,  aggregation='mean', readout='mean', use_bf16=False, tol=1e-5),
        # auto tiling: two balanced tiles (grid=(2,)) -> megacore-friendly on v7x
        dict(batch=2500, aggregation='max',  readout='sum',  use_bf16=False, tol=1e-5),
        # host-pre-cast bf16 weights/activations, f32 accumulation (relaxed tolerance)
        dict(batch=300,  aggregation='max',  readout='sum',  use_bf16=True,  tol=1e-1),
    ]

    for tc in test_cases:
        batch = tc['batch']
        k_obs, k_edge = jax.random.split(jax.random.fold_in(k_data, batch), 2)
        obs = jax.random.normal(
            k_obs, (batch, dim_body + nb_objects * dim_object), jnp.float32)
        edge_features = jax.random.normal(
            k_edge, (len(edges), batch, dim_edge), jnp.float32)

        mean, logstd = gnn_actor_forward(
            obs, edge_features, params,
            nb_objects=nb_objects, dim_body=dim_body, dim_object=dim_object,
            incoming_edges=incoming_edges, aggregation=tc['aggregation'],
            readout=tc['readout'], use_bf16=tc['use_bf16'])
        jax.block_until_ready((mean, logstd))

        mean_ref, logstd_ref = reference_forward(
            obs, edge_features, params,
            nb_objects=nb_objects, dim_body=dim_body, dim_object=dim_object,
            incoming_edges=incoming_edges, aggregation=tc['aggregation'],
            readout=tc['readout'])

        assert mean.shape == (batch, dim_rho_actor_output)
        assert logstd.shape == (batch, dim_rho_actor_output)
        tol = tc['tol']
        np.testing.assert_allclose(np.asarray(mean), np.asarray(mean_ref),
                                   rtol=tol, atol=tol)
        np.testing.assert_allclose(np.asarray(logstd), np.asarray(logstd_ref),
                                   rtol=tol, atol=tol)

    # TODO(synk): sample()/get_action_proba() (Normal rsample/cdf, tanh-squash log-prob)
    # are host-side stochastic post-processing of (mean, log_std) and are not kernelized.
    print("KERNEL_OK")
</pallas_src>

<mosaic_0001>
module attributes {stable_mosaic.version = 11 : i64} {
  func.func @_gnn_actor_kernel(%arg0: i32, %arg1: memref<8x10xf32, #tpu.memory_space<vmem>>, %arg2: memref<3x8x21xf32, #tpu.memory_space<vmem>>, %arg3: memref<10x256xf32, #tpu.memory_space<vmem>>, %arg4: memref<21x256xf32, #tpu.memory_space<vmem>>, %arg5: memref<1x256xf32, #tpu.memory_space<vmem>>, %arg6: memref<256x64xf32, #tpu.memory_space<vmem>>, %arg7: memref<1x64xf32, #tpu.memory_space<vmem>>, %arg8: memref<64x256xf32, #tpu.memory_space<vmem>>, %arg9: memref<1x256xf32, #tpu.memory_space<vmem>>, %arg10: memref<256x256xf32, #tpu.memory_space<vmem>>, %arg11: memref<1x256xf32, #tpu.memory_space<vmem>>, %arg12: memref<256x8xf32, #tpu.memory_space<vmem>>, %arg13: memref<1x8xf32, #tpu.memory_space<vmem>>, %arg14: memref<8x8xf32, #tpu.memory_space<vmem>>) attributes {dimension_semantics = [#tpu.dimension_semantics<parallel>], iteration_bounds = array<i64: 1>, scalar_prefetch = 0 : i64, scratch_operands = 0 : i64, tpu.core_type = #tpu.core_type<tc>, window_params = [{transform_indices = @transform_0, window_bounds = array<i64: 8, 10>}, {transform_indices = @transform_1, window_bounds = array<i64: 3, 8, 21>}, {pipeline_mode = #tpu.pipeline_mode<synchronous>, transform_indices = @transform_2, window_bounds = array<i64: 10, 256>}, {pipeline_mode = #tpu.pipeline_mode<synchronous>, transform_indices = @transform_3, window_bounds = array<i64: 21, 256>}, {pipeline_mode = #tpu.pipeline_mode<synchronous>, transform_indices = @transform_4, window_bounds = array<i64: 1, 256>}, {pipeline_mode = #tpu.pipeline_mode<synchronous>, transform_indices = @transform_5, window_bounds = array<i64: 256, 64>}, {pipeline_mode = #tpu.pipeline_mode<synchronous>, transform_indices = @transform_6, window_bounds = array<i64: 1, 64>}, {pipeline_mode = #tpu.pipeline_mode<synchronous>, transform_indices = @transform_7, window_bounds = array<i64: 64, 256>}, {pipeline_mode = #tpu.pipeline_mode<synchronous>, transform_indices = @transform_8, window_bounds = array<i64: 1, 256>}, {pipeline_mode = #tpu.pipeline_mode<synchronous>, transform_indices = @transform_9, window_bounds = array<i64: 256, 256>}, {pipeline_mode = #tpu.pipeline_mode<synchronous>, transform_indices = @transform_10, window_bounds = array<i64: 1, 256>}, {pipeline_mode = #tpu.pipeline_mode<synchronous>, transform_indices = @transform_11, window_bounds = array<i64: 256, 8>}, {pipeline_mode = #tpu.pipeline_mode<synchronous>, transform_indices = @transform_12, window_bounds = array<i64: 1, 8>}, {transform_indices = @transform_13, window_bounds = array<i64: 8, 8>}]} {
    %c0 = arith.constant 0 : index
    %c0_0 = arith.constant 0 : index
    %0 = vector.load %arg1[%c0, %c0_0] : memref<8x10xf32, #tpu.memory_space<vmem>>, vector<8x10xf32>
    %c0_1 = arith.constant 0 : index
    %c0_2 = arith.constant 0 : index
    %c0_3 = arith.constant 0 : index
    %1 = vector.load %arg2[%c0_1, %c0_2, %c0_3] : memref<3x8x21xf32, #tpu.memory_space<vmem>>, vector<3x8x21xf32>
    %c0_4 = arith.constant 0 : index
    %c0_5 = arith.constant 0 : index
    %2 = vector.load %arg3[%c0_4, %c0_5] : memref<10x256xf32, #tpu.memory_space<vmem>>, vector<10x256xf32>
    %cst = arith.constant dense<0.000000e+00> : vector<8x256xf32>
    %3 = tpu.matmul %0, %2, %cst {dimension_numbers = #tpu.dot_dimension_numbers<[1], [0], [0], [1], [0, 0, 1, 1], [], []>} : vector<8x10xf32>, vector<10x256xf32>, vector<8x256xf32> -> vector<8x256xf32>
    %c0_6 = arith.constant 0 : index
    %c0_7 = arith.constant 0 : index
    %4 = vector.load %arg5[%c0_6, %c0_7] : memref<1x256xf32, #tpu.memory_space<vmem>>, vector<1x256xf32>
    %5 = vector.broadcast %4 : vector<1x256xf32> to vector<8x256xf32>
    %6 = arith.addf %3, %5 : vector<8x256xf32>
    %7 = vector.shape_cast %1 : vector<3x8x21xf32> to vector<24x21xf32>
    %c0_8 = arith.constant 0 : index
    %c0_9 = arith.constant 0 : index
    %8 = vector.load %arg4[%c0_8, %c0_9] : memref<21x256xf32, #tpu.memory_space<vmem>>, vector<21x256xf32>
    %cst_10 = arith.constant dense<0.000000e+00> : vector<24x256xf32>
    %9 = tpu.matmul %7, %8, %cst_10 {dimension_numbers = #tpu.dot_dimension_numbers<[1], [0], [0], [1], [0, 0, 1, 1], [], []>} : vector<24x21xf32>, vector<21x256xf32>, vector<24x256xf32> -> vector<24x256xf32>
    %10 = vector.shape_cast %9 : vector<24x256xf32> to vector<3x8x256xf32>
    %11 = vector.shape_cast %6 : vector<8x256xf32> to vector<1x8x256xf32>
    %12 = vector.broadcast %11 : vector<1x8x256xf32> to vector<3x8x256xf32>
    %13 = arith.addf %10, %12 : vector<3x8x256xf32>
    %cst_11 = arith.constant 0.000000e+00 : f32
    %14 = vector.broadcast %cst_11 : f32 to vector<3x8x256xf32>
    %15 = arith.maximumf %13, %14 : vector<3x8x256xf32>
    %16 = vector.shape_cast %15 : vector<3x8x256xf32> to vector<24x256xf32>
    %c0_12 = arith.constant 0 : index
    %c0_13 = arith.constant 0 : index
    %17 = vector.load %arg6[%c0_12, %c0_13] : memref<256x64xf32, #tpu.memory_space<vmem>>, vector<256x64xf32>
    %cst_14 = arith.constant dense<0.000000e+00> : vector<24x64xf32>
    %18 = tpu.matmul %16, %17, %cst_14 {dimension_numbers = #tpu.dot_dimension_numbers<[1], [0], [0], [1], [0, 0, 1, 1], [], []>} : vector<24x256xf32>, vector<256x64xf32>, vector<24x64xf32> -> vector<24x64xf32>
    %c0_15 = arith.constant 0 : index
    %c0_16 = arith.constant 0 : index
    %19 = vector.load %arg7[%c0_15, %c0_16] : memref<1x64xf32, #tpu.memory_space<vmem>>, vector<1x64xf32>
    %20 = vector.broadcast %19 : vector<1x64xf32> to vector<24x64xf32>
    %21 = arith.addf %18, %20 : vector<24x64xf32>
    %cst_17 = arith.constant 0.000000e+00 : f32
    %22 = vector.broadcast %cst_17 : f32 to vector<24x64xf32>
    %23 = arith.maximumf %21, %22 : vector<24x64xf32>
    %24 = vector.shape_cast %23 : vector<24x64xf32> to vector<3x8x64xf32>
    %cst_18 = arith.constant dense<0.000000e+00> : vector<8x64xf32>
    %25 = vector.multi_reduction <add>, %24, %cst_18 [0] : vector<3x8x64xf32> to vector<8x64xf32>
    %c0_19 = arith.constant 0 : index
    %c0_20 = arith.constant 0 : index
    %26 = vector.load %arg8[%c0_19, %c0_20] : memref<64x256xf32, #tpu.memory_space<vmem>>, vector<64x256xf32>
    %cst_21 = arith.constant dense<0.000000e+00> : vector<8x256xf32>
    %27 = tpu.matmul %25, %26, %cst_21 {dimension_numbers = #tpu.dot_dimension_numbers<[1], [0], [0], [1], [0, 0, 1, 1], [], []>} : vector<8x64xf32>, vector<64x256xf32>, vector<8x256xf32> -> vector<8x256xf32>
    %c0_22 = arith.constant 0 : index
    %c0_23 = arith.constant 0 : index
    %28 = vector.load %arg9[%c0_22, %c0_23] : memref<1x256xf32, #tpu.memory_space<vmem>>, vector<1x256xf32>
    %29 = vector.broadcast %28 : vector<1x256xf32> to vector<8x256xf32>
    %30 = arith.addf %27, %29 : vector<8x256xf32>
    %cst_24 = arith.constant 0.000000e+00 : f32
    %31 = vector.broadcast %cst_24 : f32 to vector<8x256xf32>
    %32 = arith.maximumf %30, %31 : vector<8x256xf32>
    %c0_25 = arith.constant 0 : index
    %c0_26 = arith.constant 0 : index
    %33 = vector.load %arg10[%c0_25, %c0_26] : memref<256x256xf32, #tpu.memory_space<vmem>>, vector<256x256xf32>
    %cst_27 = arith.constant dense<0.000000e+00> : vector<8x256xf32>
    %34 = tpu.matmul %32, %33, %cst_27 {dimension_numbers = #tpu.dot_dimension_numbers<[1], [0], [0], [1], [0, 0, 1, 1], [], []>} : vector<8x256xf32>, vector<256x256xf32>, vector<8x256xf32> -> vector<8x256xf32>
    %c0_28 = arith.constant 0 : index
    %c0_29 = arith.constant 0 : index
    %35 = vector.load %arg11[%c0_28, %c0_29] : memref<1x256xf32, #tpu.memory_space<vmem>>, vector<1x256xf32>
    %36 = vector.broadcast %35 : vector<1x256xf32> to vector<8x256xf32>
    %37 = arith.addf %34, %36 : vector<8x256xf32>
    %cst_30 = arith.constant 0.000000e+00 : f32
    %38 = vector.broadcast %cst_30 : f32 to vector<8x256xf32>
    %39 = arith.maximumf %37, %38 : vector<8x256xf32>
    %c0_31 = arith.constant 0 : index
    %c0_32 = arith.constant 0 : index
    %40 = vector.load %arg12[%c0_31, %c0_32] : memref<256x8xf32, #tpu.memory_space<vmem>>, vector<256x8xf32>
    %cst_33 = arith.constant dense<0.000000e+00> : vector<8x8xf32>
    %41 = tpu.matmul %39, %40, %cst_33 {dimension_numbers = #tpu.dot_dimension_numbers<[1], [0], [0], [1], [0, 0, 1, 1], [], []>} : vector<8x256xf32>, vector<256x8xf32>, vector<8x8xf32> -> vector<8x8xf32>
    %c0_34 = arith.constant 0 : index
    %c0_35 = arith.constant 0 : index
    %42 = vector.load %arg13[%c0_34, %c0_35] : memref<1x8xf32, #tpu.memory_space<vmem>>, vector<1x8xf32>
    %43 = vector.broadcast %42 : vector<1x8xf32> to vector<8x8xf32>
    %44 = arith.addf %41, %43 : vector<8x8xf32>
    %45 = tpu.iota {dimensions = array<i32: 1>} : vector<8x8xi32>
    %cst_36 = arith.constant -2.000000e+01 : f32
    %cst_37 = arith.constant 2.000000e+00 : f32
    %46 = vector.broadcast %cst_36 : f32 to vector<8x8xf32>
    %47 = arith.maximumf %46, %44 : vector<8x8xf32>
    %48 = vector.broadcast %cst_37 : f32 to vector<8x8xf32>
    %49 = arith.minimumf %48, %47 : vector<8x8xf32>
    %c4_i32 = arith.constant 4 : i32
    %50 = vector.broadcast %c4_i32 : i32 to vector<8x8xi32>
    %51 = arith.cmpi sge, %45, %50 : vector<8x8xi32>
    %52 = arith.select %51, %49, %44 : vector<8x8xi1>, vector<8x8xf32>
    %c0_38 = arith.constant 0 : index
    %c0_39 = arith.constant 0 : index
    %53 = vector.load %arg14[%c0_38, %c0_39] : memref<8x8xf32, #tpu.memory_space<vmem>>, vector<8x8xf32>
    tpu.vector_store %arg14[%c0_38, %c0_39], %52 {strides = array<i32>} : memref<8x8xf32, #tpu.memory_space<vmem>>, vector<8x8xf32>,
    return
  }
  func.func @transform_0(%arg0: i32) -> (i32, i32) {
    %c0_i32 = arith.constant 0 : i32
    %c0_i32_0 = arith.constant 0 : i32
    return %arg0, %c0_i32 : i32, i32
  }
  func.func @transform_1(%arg0: i32) -> (i32, i32, i32) {
    %c0_i32 = arith.constant 0 : i32
    %c0_i32_0 = arith.constant 0 : i32
    %c0_i32_1 = arith.constant 0 : i32
    return %c0_i32, %arg0, %c0_i32_0 : i32, i32, i32
  }
  func.func @transform_2(%arg0: i32) -> (i32, i32) {
    %c0_i32 = arith.constant 0 : i32
    %c0_i32_0 = arith.constant 0 : i32
    %c0_i32_1 = arith.constant 0 : i32
    return %c0_i32, %c0_i32_0 : i32, i32
  }
  func.func @transform_3(%arg0: i32) -> (i32, i32) {
    %c0_i32 = arith.constant 0 : i32
    %c0_i32_0 = arith.constant 0 : i32
    %c0_i32_1 = arith.constant 0 : i32
    return %c0_i32, %c0_i32_0 : i32, i32
  }
  func.func @transform_4(%arg0: i32) -> (i32, i32) {
    %c0_i32 = arith.constant 0 : i32
    %c0_i32_0 = arith.constant 0 : i32
    %c0_i32_1 = arith.constant 0 : i32
    return %c0_i32, %c0_i32_0 : i32, i32
  }
  func.func @transform_5(%arg0: i32) -> (i32, i32) {
    %c0_i32 = arith.constant 0 : i32
    %c0_i32_0 = arith.constant 0 : i32
    %c0_i32_1 = arith.constant 0 : i32
    return %c0_i32, %c0_i32_0 : i32, i32
  }
  func.func @transform_6(%arg0: i32) -> (i32, i32) {
    %c0_i32 = arith.constant 0 : i32
    %c0_i32_0 = arith.constant 0 : i32
    %c0_i32_1 = arith.constant 0 : i32
    return %c0_i32, %c0_i32_0 : i32, i32
  }
  func.func @transform_7(%arg0: i32) -> (i32, i32) {
    %c0_i32 = arith.constant 0 : i32
    %c0_i32_0 = arith.constant 0 : i32
    %c0_i32_1 = arith.constant 0 : i32
    return %c0_i32, %c0_i32_0 : i32, i32
  }
  func.func @transform_8(%arg0: i32) -> (i32, i32) {
    %c0_i32 = arith.constant 0 : i32
    %c0_i32_0 = arith.constant 0 : i32
    %c0_i32_1 = arith.constant 0 : i32
    return %c0_i32, %c0_i32_0 : i32, i32
  }
  func.func @transform_9(%arg0: i32) -> (i32, i32) {
    %c0_i32 = arith.constant 0 : i32
    %c0_i32_0 = arith.constant 0 : i32
    %c0_i32_1 = arith.constant 0 : i32
    return %c0_i32, %c0_i32_0 : i32, i32
  }
  func.func @transform_10(%arg0: i32) -> (i32, i32) {
    %c0_i32 = arith.constant 0 : i32
    %c0_i32_0 = arith.constant 0 : i32
    %c0_i32_1 = arith.constant 0 : i32
    return %c0_i32, %c0_i32_0 : i32, i32
  }
  func.func @transform_11(%arg0: i32) -> (i32, i32) {
    %c0_i32 = arith.constant 0 : i32
    %c0_i32_0 = arith.constant 0 : i32
    %c0_i32_1 = arith.constant 0 : i32
    return %c0_i32, %c0_i32_0 : i32, i32
  }
  func.func @transform_12(%arg0: i32) -> (i32, i32) {
    %c0_i32 = arith.constant 0 : i32
    %c0_i32_0 = arith.constant 0 : i32
    %c0_i32_1 = arith.constant 0 : i32
    return %c0_i32, %c0_i32_0 : i32, i32
  }
  func.func @transform_13(%arg0: i32) -> (i32, i32) {
    %c0_i32 = arith.constant 0 : i32
    %c0_i32_0 = arith.constant 0 : i32
    return %arg0, %c0_i32 : i32, i32
  }
}

</mosaic_0001>

<llo_original>
// kernel: tpu_custom_call.1
$region0: #{tpu_custom_call.1}
  #allocation0 [shape = 'u32[]', space=smem, size = 0x4, offset = 0x4, fixed_abs, tag = 'smem constant byte address 0x4 - core index']
  #allocation1 [shape = 'u32[144,128]{1,0:T(1,128)}', space=vmem, size = 0x12000, scoped, tag = 'internal scratch']
  %s0 = inlined_call_operand.hbm [shape: f32[8,10], index: 0, kind: input, shape index: {}]
  %s1 = inlined_call_operand.hbm [shape: f32[3,8,21], index: 1, kind: input, shape index: {}]
  %s2 = inlined_call_operand.hbm [shape: f32[10,256], index: 2, kind: input, shape index: {}]
  %s3 = inlined_call_operand.hbm [shape: f32[21,256], index: 3, kind: input, shape index: {}]
  %s4 = inlined_call_operand.hbm [shape: f32[1,256], index: 4, kind: input, shape index: {}]
  %s5 = inlined_call_operand.hbm [shape: f32[256,64], index: 5, kind: input, shape index: {}]
  %s6 = inlined_call_operand.hbm [shape: f32[1,64], index: 6, kind: input, shape index: {}]
  %s7 = inlined_call_operand.hbm [shape: f32[64,256], index: 7, kind: input, shape index: {}]
  %s8 = inlined_call_operand.hbm [shape: f32[1,256], index: 8, kind: input, shape index: {}]
  %s9 = inlined_call_operand.hbm [shape: f32[256,256], index: 9, kind: input, shape index: {}]
  %s10 = inlined_call_operand.hbm [shape: f32[1,256], index: 10, kind: input, shape index: {}]
  %s11 = inlined_call_operand.hbm [shape: f32[256,8], index: 11, kind: input, shape index: {}]
  %s12 = inlined_call_operand.hbm [shape: f32[1,8], index: 12, kind: input, shape index: {}]
  %s13 = inlined_call_operand.hbm [shape: f32[8,8], index: 13, kind: output, shape index: {}]
  %s14 = sld [smem:[#allocation0]]
  $region114: #{tpu_custom_call.1} parent=0
    _
  %s16 = ssub.s32 1, %s14
  %s17 = scalar_select 0, %s16, %s14
  $region1: #{tpu_custom_call.1} parent=0
    #allocation2 [shape = 'u8[4096]{0}', space=vmem, size = 0x1000, scoped, tag = 'input window, operand 0, single buffered']
    #allocation3 [shape = 's32[1]{0}', space=sflag, size = 0x4, scoped, tag = 'scoped memory for tpu_custom_call.1']
    #allocation4 [shape = 's32[1]{0}', space=sflag, size = 0x4, scoped, tag = 'scoped memory for tpu_custom_call.1']
    #allocation5 [shape = 'u8[12288]{0}', space=vmem, size = 0x3000, scoped, tag = 'input window, operand 1, single buffered']
    #allocation6 [shape = 's32[1]{0}', space=sflag, size = 0x4, scoped, tag = 'scoped memory for tpu_custom_call.1']
    #allocation7 [shape = 'u8[16384]{0}', space=vmem, size = 0x4000, scoped, tag = 'input window, operand 2, single buffered']
    #allocation8 [shape = 'u8[24576]{0}', space=vmem, size = 0x6000, scoped, tag = 'input window, operand 3, single buffered']
    #allocation9 [shape = 's32[1]{0}', space=sflag, size = 0x4, scoped, tag = 'scoped memory for tpu_custom_call.1']
    #allocation10 [shape = 'u8[1024]{0}', space=vmem, size = 0x400, scoped, tag = 'input window, operand 4, single buffered']
    #allocation11 [shape = 'u8[131072]{0}', space=vmem, size = 0x20000, scoped, tag = 'input window, operand 5, single buffered']
    #allocation12 [shape = 's32[1]{0}', space=sflag, size = 0x4, scoped, tag = 'scoped memory for tpu_custom_call.1']
    #allocation13 [shape = 'u8[512]{0}', space=vmem, size = 0x400, scoped, tag = 'input window, operand 6, single buffered']
    #allocation14 [shape = 'u8[65536]{0}', space=vmem, size = 0x10000, scoped, tag = 'input window, operand 7, single buffered']
    #allocation15 [shape = 's32[1]{0}', space=sflag, size = 0x4, scoped, tag = 'scoped memory for tpu_custom_call.1']
    #allocation16 [shape = 'u8[1024]{0}', space=vmem, size = 0x400, scoped, tag = 'input window, operand 8, single buffered']
    #allocation17 [shape = 'u8[262144]{0}', space=vmem, size = 0x40000, scoped, tag = 'input window, operand 9, single buffered']
    #allocation18 [shape = 's32[1]{0}', space=sflag, size = 0x4, scoped, tag = 'scoped memory for tpu_custom_call.1']
    #allocation19 [shape = 'u8[1024]{0}', space=vmem, size = 0x400, scoped, tag = 'input window, operand 10, single buffered']
    #allocation20 [shape = 'u8[131072]{0}', space=vmem, size = 0x20000, scoped, tag = 'input window, operand 11, single buffered']
    #allocation21 [shape = 's32[1]{0}', space=sflag, size = 0x4, scoped, tag = 'scoped memory for tpu_custom_call.1']
    #allocation22 [shape = 'u8[512]{0}', space=vmem, size = 0x400, scoped, tag = 'input window, operand 12, single buffered']
    #allocation23 [shape = 'u8[4096]{0}', space=vmem, size = 0x1000, scoped, tag = 'output window, operand 0, single buffered']
    %18 = vsyncpa [#allocation3], 0
    %19 = vsyncpa [#allocation6], 0
    %20 = vsyncpa [#allocation9], 0
    %21 = vsyncpa [#allocation12], 0
    %22 = vsyncpa [#allocation15], 0
    %23 = vsyncpa [#allocation18], 0
    %24 = vsyncpa [#allocation21], 0
    %25 = vsyncpa [#allocation4], 0
    // Predicated region
    $region2: #{tpu_custom_call.1} parent=1 // pred_check
      _
    $region3: #{tpu_custom_call.1} parent=1 // pred_check_branch
      %27 = sbr.rel (0) target = $region5
    $region4: #{tpu_custom_call.1} parent=1 // pred_region
      %s29 = ssub.s32 128, 128
      %30 = vsyncadd [#allocation3], %s29
      %s32 = sshll.u32 [#allocation2], 4
      %s33 = int_to_ptr.vmem [resolvable:$true] %s32
      %35 = dma.hbm_to_vmem [thread:$0]  %s0, 128, %s33, [#allocation3]
    $region5: #{tpu_custom_call.1} parent=1 // pred_fallthru
      _
    // Predicated region
    $region6: #{tpu_custom_call.1} parent=1 // pred_check
      _
    $region7: #{tpu_custom_call.1} parent=1 // pred_check_branch
      %37 = sbr.rel (0) target = $region9
    $region8: #{tpu_custom_call.1} parent=1 // pred_region
      %s39 = ssub.s32 384, 384
      %40 = vsyncadd [#allocation6], %s39
      %s41 = sshll.u32 [#allocation5], 4
      %s42 = int_to_ptr.vmem [resolvable:$true] %s41
      %47 = dma.hbm_to_vmem [thread:$0]  %s1, 384, %s42, [#allocation6], 128, 128, 8
    $region9: #{tpu_custom_call.1} parent=1 // pred_fallthru
      _
    // Predicated region
    $region10: #{tpu_custom_call.1} parent=1 // pred_check
      _
    $region11: #{tpu_custom_call.1} parent=1 // pred_check_branch
      %49 = sbr.rel (0) target = $region13
    $region12: #{tpu_custom_call.1} parent=1 // pred_region
      %s51 = ssub.s32 512, 512
      %52 = vsyncadd [#allocation6], %s51
      %s53 = sshll.u32 [#allocation7], 4
      %s54 = int_to_ptr.vmem [resolvable:$true] %s53
      %59 = dma.hbm_to_vmem [thread:$0]  %s2, 512, %s54, [#allocation6], 256, 256, 16
    $region13: #{tpu_custom_call.1} parent=1 // pred_fallthru
      _
    // Predicated region
    $region14: #{tpu_custom_call.1} parent=1 // pred_check
      _
    $region15: #{tpu_custom_call.1} parent=1 // pred_check_branch
      %61 = sbr.rel (0) target = $region17
    $region16: #{tpu_custom_call.1} parent=1 // pred_region
      %s63 = ssub.s32 768, 768
      %64 = vsyncadd [#allocation9], %s63
      %s65 = sshll.u32 [#allocation8], 4
      %s66 = int_to_ptr.vmem [resolvable:$true] %s65
      %71 = dma.hbm_to_vmem [thread:$0]  %s3, 768, %s66, [#allocation9], 256, 256, 16
    $region17: #{tpu_custom_call.1} parent=1 // pred_fallthru
      _
    // Predicated region
    $region18: #{tpu_custom_call.1} parent=1 // pred_check
      _
    $region19: #{tpu_custom_call.1} parent=1 // pred_check_branch
      %73 = sbr.rel (0) target = $region21
    $region20: #{tpu_custom_call.1} parent=1 // pred_region
      %s75 = ssub.s32 32, 32
      %76 = vsyncadd [#allocation9], %s75
      %s78 = sshll.u32 [#allocation10], 4
      %s79 = int_to_ptr.vmem [resolvable:$true] %s78
      %81 = dma.hbm_to_vmem [thread:$0]  %s4, 32, %s79, [#allocation9]
    $region21: #{tpu_custom_call.1} parent=1 // pred_fallthru
      _
    // Predicated region
    $region22: #{tpu_custom_call.1} parent=1 // pred_check
      _
    $region23: #{tpu_custom_call.1} parent=1 // pred_check_branch
      %83 = sbr.rel (0) target = $region25
    $region24: #{tpu_custom_call.1} parent=1 // pred_region
      %s85 = ssub.s32 4096, 4096
      %86 = vsyncadd [#allocation12], %s85
      %s87 = sshll.u32 [#allocation11], 4
      %s88 = int_to_ptr.vmem [resolvable:$true] %s87
      %93 = dma.hbm_to_vmem [thread:$0]  %s5, 4096, %s88, [#allocation12], 128, 128, 8
    $region25: #{tpu_custom_call.1} parent=1 // pred_fallthru
      _
    // Predicated region
    $region26: #{tpu_custom_call.1} parent=1 // pred_check
      _
    $region27: #{tpu_custom_call.1} parent=1 // pred_check_branch
      %95 = sbr.rel (0) target = $region29
    $region28: #{tpu_custom_call.1} parent=1 // pred_region
      %s97 = ssub.s32 16, 16
      %98 = vsyncadd [#allocation12], %s97
      %s100 = sshll.u32 [#allocation13], 4
      %s101 = int_to_ptr.vmem [resolvable:$true] %s100
      %103 = dma.hbm_to_vmem [thread:$0]  %s6, 16, %s101, [#allocation12]
    $region29: #{tpu_custom_call.1} parent=1 // pred_fallthru
      _
    // Predicated region
    $region30: #{tpu_custom_call.1} parent=1 // pred_check
      _
    $region31: #{tpu_custom_call.1} parent=1 // pred_check_branch
      %105 = sbr.rel (0) target = $region33
    $region32: #{tpu_custom_call.1} parent=1 // pred_region
      %s107 = ssub.s32 2048, 2048
      %108 = vsyncadd [#allocation15], %s107
      %s109 = sshll.u32 [#allocation14], 4
      %s110 = int_to_ptr.vmem [resolvable:$true] %s109
      %115 = dma.hbm_to_vmem [thread:$0]  %s7, 2048, %s110, [#allocation15], 256, 256, 16
    $region33: #{tpu_custom_call.1} parent=1 // pred_fallthru
      _
    // Predicated region
    $region34: #{tpu_custom_call.1} parent=1 // pred_check
      _
    $region35: #{tpu_custom_call.1} parent=1 // pred_check_branch
      %117 = sbr.rel (0) target = $region37
    $region36: #{tpu_custom_call.1} parent=1 // pred_region
      %s119 = ssub.s32 32, 32
      %120 = vsyncadd [#allocation15], %s119
      %s122 = sshll.u32 [#allocation16], 4
      %s123 = int_to_ptr.vmem [resolvable:$true] %s122
      %125 = dma.hbm_to_vmem [thread:$0]  %s8, 32, %s123, [#allocation15]
    $region37: #{tpu_custom_call.1} parent=1 // pred_fallthru
      _
    // Predicated region
    $region38: #{tpu_custom_call.1} parent=1 // pred_check
      _
    $region39: #{tpu_custom_call.1} parent=1 // pred_check_branch
      %127 = sbr.rel (0) target = $region41
    $region40: #{tpu_custom_call.1} parent=1 // pred_region
      %s129 = ssub.s32 8192, 8192
      %130 = vsyncadd [#allocation18], %s129
      %s131 = sshll.u32 [#allocation17], 4
      %s132 = int_to_ptr.vmem [resolvable:$true] %s131
      %137 = dma.hbm_to_vmem [thread:$0]  %s9, 8192, %s132, [#allocation18], 256, 256, 16
    $region41: #{tpu_custom_call.1} parent=1 // pred_fallthru
      _
    // Predicated region
    $region42: #{tpu_custom_call.1} parent=1 // pred_check
      _
    $region43: #{tpu_custom_call.1} parent=1 // pred_check_branch
      %139 = sbr.rel (0) target = $region45
    $region44: #{tpu_custom_call.1} parent=1 // pred_region
      %s141 = ssub.s32 32, 32
      %142 = vsyncadd [#allocation18], %s141
      %s144 = sshll.u32 [#allocation19], 4
      %s145 = int_to_ptr.vmem [resolvable:$true] %s144
      %147 = dma.hbm_to_vmem [thread:$0]  %s10, 32, %s145, [#allocation18]
    $region45: #{tpu_custom_call.1} parent=1 // pred_fallthru
      _
    // Predicated region
    $region46: #{tpu_custom_call.1} parent=1 // pred_check
      _
    $region47: #{tpu_custom_call.1} parent=1 // pred_check_branch
      %149 = sbr.rel (0) target = $region49
    $region48: #{tpu_custom_call.1} parent=1 // pred_region
      %s151 = ssub.s32 4096, 4096
      %152 = vsyncadd [#allocation21], %s151
      %s153 = sshll.u32 [#allocation20], 4
      %s154 = int_to_ptr.vmem [resolvable:$true] %s153
      %159 = dma.hbm_to_vmem [thread:$0]  %s11, 4096, %s154, [#allocation21], 128, 128, 8
    $region49: #{tpu_custom_call.1} parent=1 // pred_fallthru
      _
    // Predicated region
    $region50: #{tpu_custom_call.1} parent=1 // pred_check
      _
    $region51: #{tpu_custom_call.1} parent=1 // pred_check_branch
      %161 = sbr.rel (0) target = $region53
    $region52: #{tpu_custom_call.1} parent=1 // pred_region
      %s163 = ssub.s32 16, 16
      %164 = vsyncadd [#allocation21], %s163
      %s166 = sshll.u32 [#allocation22], 4
      %s167 = int_to_ptr.vmem [resolvable:$true] %s166
      %169 = dma.hbm_to_vmem [thread:$0]  %s12, 16, %s167, [#allocation21]
    $region53: #{tpu_custom_call.1} parent=1 // pred_fallthru
      _
    // Predicated region
    $region54: #{tpu_custom_call.1} parent=1 // pred_check
      _
    $region55: #{tpu_custom_call.1} parent=1 // pred_check_branch
      %171 = sbr.rel (0) target = $region57
    $region56: #{tpu_custom_call.1} parent=1 // pred_region
      %172 = dma.done [#allocation3], 128
    $region57: #{tpu_custom_call.1} parent=1 // pred_fallthru
      _
    // Predicated region
    $region58: #{tpu_custom_call.1} parent=1 // pred_check
      _
    $region59: #{tpu_custom_call.1} parent=1 // pred_check_branch
      %174 = sbr.rel (0) target = $region61
    $region60: #{tpu_custom_call.1} parent=1 // pred_region
      %175 = dma.done [#allocation6], 384
    $region61: #{tpu_custom_call.1} parent=1 // pred_fallthru
      _
    // Predicated region
    $region62: #{tpu_custom_call.1} parent=1 // pred_check
      _
    $region63: #{tpu_custom_call.1} parent=1 // pred_check_branch
      %177 = sbr.rel (0) target = $region65
    $region64: #{tpu_custom_call.1} parent=1 // pred_region
      %178 = dma.done [#allocation6], 512
    $region65: #{tpu_custom_call.1} parent=1 // pred_fallthru
      _
    // Predicated region
    $region66: #{tpu_custom_call.1} parent=1 // pred_check
      _
    $region67: #{tpu_custom_call.1} parent=1 // pred_check_branch
      %180 = sbr.rel (0) target = $region69
    $region68: #{tpu_custom_call.1} parent=1 // pred_region
      %181 = dma.done [#allocation9], 768
    $region69: #{tpu_custom_call.1} parent=1 // pred_fallthru
      _
    // Predicated region
    $region70: #{tpu_custom_call.1} parent=1 // pred_check
      _
    $region71: #{tpu_custom_call.1} parent=1 // pred_check_branch
      %183 = sbr.rel (0) target = $region73
    $region72: #{tpu_custom_call.1} parent=1 // pred_region
      %184 = dma.done [#allocation9], 32
    $region73: #{tpu_custom_call.1} parent=1 // pred_fallthru
      _
    // Predicated region
    $region74: #{tpu_custom_call.1} parent=1 // pred_check
      _
    $region75: #{tpu_custom_call.1} parent=1 // pred_check_branch
      %186 = sbr.rel (0) target = $region77
    $region76: #{tpu_custom_call.1} parent=1 // pred_region
      %187 = dma.done [#allocation12], 4096
    $region77: #{tpu_custom_call.1} parent=1 // pred_fallthru
      _
    // Predicated region
    $region78: #{tpu_custom_call.1} parent=1 // pred_check
      _
    $region79: #{tpu_custom_call.1} parent=1 // pred_check_branch
      %189 = sbr.rel (0) target = $region81
    $region80: #{tpu_custom_call.1} parent=1 // pred_region
      %190 = dma.done [#allocation12], 16
    $region81: #{tpu_custom_call.1} parent=1 // pred_fallthru
      _
    // Predicated region
    $region82: #{tpu_custom_call.1} parent=1 // pred_check
      _
    $region83: #{tpu_custom_call.1} parent=1 // pred_check_branch
      %192 = sbr.rel (0) target = $region85
    $region84: #{tpu_custom_call.1} parent=1 // pred_region
      %193 = dma.done [#allocation15], 2048
    $region85: #{tpu_custom_call.1} parent=1 // pred_fallthru
      _
    // Predicated region
    $region86: #{tpu_custom_call.1} parent=1 // pred_check
      _
    $region87: #{tpu_custom_call.1} parent=1 // pred_check_branch
      %195 = sbr.rel (0) target = $region89
    $region88: #{tpu_custom_call.1} parent=1 // pred_region
      %196 = dma.done [#allocation15], 32
    $region89: #{tpu_custom_call.1} parent=1 // pred_fallthru
      _
    // Predicated region
    $region90: #{tpu_custom_call.1} parent=1 // pred_check
      _
    $region91: #{tpu_custom_call.1} parent=1 // pred_check_branch
      %198 = sbr.rel (0) target = $region93
    $region92: #{tpu_custom_call.1} parent=1 // pred_region
      %199 = dma.done [#allocation18], 8192
    $region93: #{tpu_custom_call.1} parent=1 // pred_fallthru
      _
    // Predicated region
    $region94: #{tpu_custom_call.1} parent=1 // pred_check
      _
    $region95: #{tpu_custom_call.1} parent=1 // pred_check_branch
      %201 = sbr.rel (0) target = $region97
    $region96: #{tpu_custom_call.1} parent=1 // pred_region
      %202 = dma.done [#allocation18], 32
    $region97: #{tpu_custom_call.1} parent=1 // pred_fallthru
      _
    // Predicated region
    $region98: #{tpu_custom_call.1} parent=1 // pred_check
      _
    $region99: #{tpu_custom_call.1} parent=1 // pred_check_branch
      %204 = sbr.rel (0) target = $region101
    $region100: #{tpu_custom_call.1} parent=1 // pred_region
      %205 = dma.done [#allocation21], 4096
    $region101: #{tpu_custom_call.1} parent=1 // pred_fallthru
      _
    // Predicated region
    $region102: #{tpu_custom_call.1} parent=1 // pred_check
      _
    $region103: #{tpu_custom_call.1} parent=1 // pred_check_branch
      %207 = sbr.rel (0) target = $region105
    $region104: #{tpu_custom_call.1} parent=1 // pred_region
      %208 = dma.done [#allocation21], 16
    $region105: #{tpu_custom_call.1} parent=1 // pred_fallthru
      _
    %v209 = vld [vmem:[#allocation2] sm:$0xff]
    %v210 = vld [vmem:[#allocation5] sm:$0xff]
    %v211 = vld [vmem:[#allocation5 + $0x8] sm:$0xff]
    %v212 = vld [vmem:[#allocation5 + $0x10] sm:$0xff]
    %v213 = vld [vmem:[#allocation7] sm:$0xff]
    %v214 = vld [vmem:[#allocation7 + $0x8] sm:$0xff]
    %v215 = vld [vmem:[#allocation7 + $0x10] sm:$0x3]
    %v216 = vld [vmem:[#allocation7 + $0x18] sm:$0x3]
    %v217 = vld [vmem:[#allocation10] sm:$0x3]
    %v219 = vlaneseq
    %v220 = vshrl.u32 %v219, 7
    %v221 = vsub.s32 0, %v220
    %v222 = vrot.slane %v217, %v221
    %v223 = vlaneseq
    %v224 = vshrl.u32 %v223, 7
    %v225 = vsub.s32 1, %v224
    %v226 = vrot.slane %v217, %v225
    %vm229 = vcmask 80896
    %v231 = vsel %vm229, %v209, 0
    %vm233 = vcmask 1041408
    %v235 = vsel %vm233, %v215, 0
    %v238 = vsel %vm233, %v216, 0
    %240 = vmatprep.subr.mxu0 %v214
    %241 = vmatpush1.msra.mxu0 %v213
    %242 = vmatprep.subr.mxu0 %v238
    %243 = vmatpush1.msra.mxu0 %v235
    %244 = vmatprep.subr.mxu0 0.0
    %245 = vmatpush1.msra.mxu0 0.0
    %246 = vmatprep.subr.mxu0 0.0
    %247 = vmatpush1.msra.mxu0 0.0
    %248 = vmatprep.subr.mxu0 0.0
    %249 = vmatpush1.msra.mxu0 0.0
    %250 = vmatprep.subr.mxu0 0.0
    %251 = vmatpush1.msra.mxu0 0.0
    %252 = vmatprep.subr.mxu0 0.0
    %253 = vmatpush1.msra.mxu0 0.0
    %254 = vmatprep.subr.mxu0 0.0
    %255 = vmatpush1.msra.mxu0 0.0
    %256 = vmatprep.subr.mxu0 0.0
    %257 = vmatpush1.msra.mxu0 0.0
    %258 = vmatprep.subr.mxu0 0.0
    %259 = vmatpush1.msra.mxu0 0.0
    %260 = vmatprep.subr.mxu0 0.0
    %261 = vmatpush1.msra.mxu0 0.0
    %262 = vmatprep.subr.mxu0 0.0
    %263 = vmatpush1.msra.mxu0 0.0
    %264 = vmatprep.subr.mxu0 0.0
    %265 = vmatpush1.msra.mxu0 0.0
    %266 = vmatprep.subr.mxu0 0.0
    %267 = vmatpush1.msra.mxu0 0.0
    %268 = vmatprep.subr.mxu0 0.0
    %269 = vmatpush1.msra.mxu0 0.0
    %270 = vmatprep.subr.mxu0 0.0
    %271 = vmatpush1.msra.mxu0 0.0
    %272 = vmatprep.subr.mxu0 0.0
    %273 = vmatpush1.msra.mxu0 0.0
    %274 = vmatprep.subr.mxu0 0.0
    %275 = vmatpush1.msra.mxu0 0.0
    %276 = vmatprep.subr.mxu0 0.0
    %277 = vmatpush1.msra.mxu0 0.0
    %278 = vmatprep.subr.mxu0 0.0
    %279 = vmatpush1.msra.mxu0 0.0
    %280 = vmatprep.subr.mxu0 0.0
    %281 = vmatpush1.msra.mxu0 0.0
    %282 = vmatprep.subr.mxu0 0.0
    %283 = vmatpush1.msra.mxu0 0.0
    %284 = vmatprep.subr.mxu0 0.0
    %285 = vmatpush1.msra.mxu0 0.0
    %286 = vmatprep.subr.mxu0 0.0
    %287 = vmatpush1.msra.mxu0 0.0
    %288 = vmatprep.subr.mxu0 0.0
    %289 = vmatpush1.msra.mxu0 0.0
    %290 = vmatprep.subr.mxu0 0.0
    %291 = vmatpush1.msra.mxu0 0.0
    %292 = vmatprep.subr.mxu0 0.0
    %293 = vmatpush1.msra.mxu0 0.0
    %294 = vmatprep.subr.mxu0 0.0
    %295 = vmatpush1.msra.mxu0 0.0
    %296 = vmatprep.subr.mxu0 0.0
    %297 = vmatpush1.msra.mxu0 0.0
    %298 = vmatprep.subr.mxu0 0.0
    %299 = vmatpush1.msra.mxu0 0.0
    %300 = vmatprep.subr.mxu0 0.0
    %301 = vmatpush1.msra.mxu0 0.0
    %302 = vmatprep.subr.mxu0 0.0
    %303 = vmatpush1.msra.mxu0 0.0
    %304 = vmatprep.mubr.f32.mxu0 0.0
    %305 = vmatmul.mubr.f32.gmra.mrb[0].mxu0 %v231
    %v306 = vpop.f32.mrb[0].mxu0
    %v307 = vadd.f32 %v222, %v306
    %v308 = vpop.f32.mrb[0].mxu0
    %v309 = vadd.f32 %v226, %v308
    %310 = vdwg.mxu0
    %v311 = vld [vmem:[#allocation8] sm:$0xff]
    %v312 = vld [vmem:[#allocation8 + $0x8] sm:$0xff]
    %v313 = vld [vmem:[#allocation8 + $0x10] sm:$0xff]
    %v314 = vld [vmem:[#allocation8 + $0x18] sm:$0xff]
    %v315 = vld [vmem:[#allocation8 + $0x20] sm:$0x1f]
    %v316 = vld [vmem:[#allocation8 + $0x28] sm:$0x1f]
    %vm317 = vcmask 171008
    %v319 = vsel %vm317, %v210, 0
    %v322 = vsel %vm317, %v211, 0
    %v325 = vsel %vm317, %v212, 0
    %vm327 = vcmask 1044480
    %v329 = vsel %vm327, %v315, 0
    %v332 = vsel %vm327, %v316, 0
    %334 = vmatprep.subr.mxu0 %v312
    %335 = vmatpush1.msra.mxu0 %v311
    %336 = vmatprep.subr.mxu0 %v314
    %337 = vmatpush1.msra.mxu0 %v313
    %338 = vmatprep.subr.mxu0 %v332
    %339 = vmatpush1.msra.mxu0 %v329
    %340 = vmatprep.subr.mxu0 0.0
    %341 = vmatpush1.msra.mxu0 0.0
    %342 = vmatprep.subr.mxu0 0.0
    %343 = vmatpush1.msra.mxu0 0.0
    %344 = vmatprep.subr.mxu0 0.0
    %345 = vmatpush1.msra.mxu0 0.0
    %346 = vmatprep.subr.mxu0 0.0
    %347 = vmatpush1.msra.mxu0 0.0
    %348 = vmatprep.subr.mxu0 0.0
    %349 = vmatpush1.msra.mxu0 0.0
    %350 = vmatprep.subr.mxu0 0.0
    %351 = vmatpush1.msra.mxu0 0.0
    %352 = vmatprep.subr.mxu0 0.0
    %353 = vmatpush1.msra.mxu0 0.0
    %354 = vmatprep.subr.mxu0 0.0
    %355 = vmatpush1.msra.mxu0 0.0
    %356 = vmatprep.subr.mxu0 0.0
    %357 = vmatpush1.msra.mxu0 0.0
    %358 = vmatprep.subr.mxu0 0.0
    %359 = vmatpush1.msra.mxu0 0.0
    %360 = vmatprep.subr.mxu0 0.0
    %361 = vmatpush1.msra.mxu0 0.0
    %362 = vmatprep.subr.mxu0 0.0
    %363 = vmatpush1.msra.mxu0 0.0
    %364 = vmatprep.subr.mxu0 0.0
    %365 = vmatpush1.msra.mxu0 0.0
    %366 = vmatprep.subr.mxu0 0.0
    %367 = vmatpush1.msra.mxu0 0.0
    %368 = vmatprep.subr.mxu0 0.0
    %369 = vmatpush1.msra.mxu0 0.0
    %370 = vmatprep.subr.mxu0 0.0
    %371 = vmatpush1.msra.mxu0 0.0
    %372 = vmatprep.subr.mxu0 0.0
    %373 = vmatpush1.msra.mxu0 0.0
    %374 = vmatprep.subr.mxu0 0.0
    %375 = vmatpush1.msra.mxu0 0.0
    %376 = vmatprep.subr.mxu0 0.0
    %377 = vmatpush1.msra.mxu0 0.0
    %378 = vmatprep.subr.mxu0 0.0
    %379 = vmatpush1.msra.mxu0 0.0
    %380 = vmatprep.subr.mxu0 0.0
    %381 = vmatpush1.msra.mxu0 0.0
    %382 = vmatprep.subr.mxu0 0.0
    %383 = vmatpush1.msra.mxu0 0.0
    %384 = vmatprep.subr.mxu0 0.0
    %385 = vmatpush1.msra.mxu0 0.0
    %386 = vmatprep.subr.mxu0 0.0
    %387 = vmatpush1.msra.mxu0 0.0
    %388 = vmatprep.subr.mxu0 0.0
    %389 = vmatpush1.msra.mxu0 0.0
    %390 = vmatprep.subr.mxu0 0.0
    %391 = vmatpush1.msra.mxu0 0.0
    %392 = vmatprep.subr.mxu0 0.0
    %393 = vmatpush1.msra.mxu0 0.0
    %394 = vmatprep.subr.mxu0 0.0
    %395 = vmatpush1.msra.mxu0 0.0
    %396 = vmatprep.subr.mxu0 0.0
    %397 = vmatpush1.msra.mxu0 0.0
    %398 = vmatprep.mubr.f32.mxu0 0.0
    %399 = vmatmul.mubr.f32.gmra.mrb[0].mxu0 %v319
    %v400 = vpop.f32.mrb[0].mxu0
    %v401 = vadd.f32 0.0, %v400
    %v402 = vpop.f32.mrb[0].mxu0
    %v403 = vadd.f32 0.0, %v402
    %404 = vmatprep.mubr.f32.mxu0 0.0
    %405 = vmatmul.mubr.f32.gmra.mrb[0].mxu0 %v322
    %v406 = vpop.f32.mrb[0].mxu0
    %v407 = vadd.f32 0.0, %v406
    %v408 = vpop.f32.mrb[0].mxu0
    %v409 = vadd.f32 0.0, %v408
    %410 = vmatprep.mubr.f32.mxu0 0.0
    %411 = vmatmul.mubr.f32.gmra.mrb[0].mxu0 %v325
    %v412 = vpop.f32.mrb[0].mxu0
    %v413 = vadd.f32 0.0, %v412
    %v414 = vpop.f32.mrb[0].mxu0
    %v415 = vadd.f32 0.0, %v414
    %416 = vdwg.mxu0
    %v417 = vadd.f32 %v401, %v307
    %v418 = vadd.f32 %v403, %v309
    %v419 = vadd.f32 %v407, %v307
    %v420 = vadd.f32 %v409, %v309
    %v421 = vadd.f32 %v413, %v307
    %v422 = vadd.f32 %v415, %v309
    %v423 = vmax.f32 %v417, 0.0
    %v424 = vmax.f32 %v418, 0.0
    %v425 = vmax.f32 %v419, 0.0
    %v426 = vmax.f32 %v420, 0.0
    %v427 = vmax.f32 %v421, 0.0
    %v428 = vmax.f32 %v422, 0.0
    %v429 = vld [vmem:[#allocation11] sm:$0xff]
    %v430 = vld [vmem:[#allocation11 + $0x8] sm:$0xff]
    %v431 = vld [vmem:[#allocation11 + $0x10] sm:$0xff]
    %v432 = vld [vmem:[#allocation11 + $0x18] sm:$0xff]
    %v433 = vld [vmem:[#allocation11 + $0x20] sm:$0xff]
    %v434 = vld [vmem:[#allocation11 + $0x28] sm:$0xff]
    %v435 = vld [vmem:[#allocation11 + $0x30] sm:$0xff]
    %v436 = vld [vmem:[#allocation11 + $0x38] sm:$0xff]
    %v437 = vld [vmem:[#allocation11 + $0x40] sm:$0xff]
    %v438 = vld [vmem:[#allocation11 + $0x48] sm:$0xff]
    %v439 = vld [vmem:[#allocation11 + $0x50] sm:$0xff]
    %v440 = vld [vmem:[#allocation11 + $0x58] sm:$0xff]
    %v441 = vld [vmem:[#allocation11 + $0x60] sm:$0xff]
    %v442 = vld [vmem:[#allocation11 + $0x68] sm:$0xff]
    %v443 = vld [vmem:[#allocation11 + $0x70] sm:$0xff]
    %v444 = vld [vmem:[#allocation11 + $0x78] sm:$0xff]
    %v445 = vld [vmem:[#allocation11 + $0x80] sm:$0xff]
    %v446 = vld [vmem:[#allocation11 + $0x88] sm:$0xff]
    %v447 = vld [vmem:[#allocation11 + $0x90] sm:$0xff]
    %v448 = vld [vmem:[#allocation11 + $0x98] sm:$0xff]
    %v449 = vld [vmem:[#allocation11 + $0xa0] sm:$0xff]
    %v450 = vld [vmem:[#allocation11 + $0xa8] sm:$0xff]
    %v451 = vld [vmem:[#allocation11 + $0xb0] sm:$0xff]
    %v452 = vld [vmem:[#allocation11 + $0xb8] sm:$0xff]
    %v453 = vld [vmem:[#allocation11 + $0xc0] sm:$0xff]
    %v454 = vld [vmem:[#allocation11 + $0xc8] sm:$0xff]
    %v455 = vld [vmem:[#allocation11 + $0xd0] sm:$0xff]
    %v456 = vld [vmem:[#allocation11 + $0xd8] sm:$0xff]
    %v457 = vld [vmem:[#allocation11 + $0xe0] sm:$0xff]
    %v458 = vld [vmem:[#allocation11 + $0xe8] sm:$0xff]
    %v459 = vld [vmem:[#allocation11 + $0xf0] sm:$0xff]
    %v460 = vld [vmem:[#allocation11 + $0xf8] sm:$0xff]
    %v461 = vld [vmem:[#allocation13] sm:$0x1]
    %v463 = vlaneseq
    %v464 = vshrl.u32 %v463, 7
    %v465 = vsub.s32 0, %v464
    %v466 = vrot.slane %v461, %v465
    %468 = vmatprep.subr.mxu0 0.0
    %469 = vmatpush1.msra.mxu0 %v429
    %470 = vmatprep.subr.mxu0 0.0
    %471 = vmatpush1.msra.mxu0 %v430
    %472 = vmatprep.subr.mxu0 0.0
    %473 = vmatpush1.msra.mxu0 %v431
    %474 = vmatprep.subr.mxu0 0.0
    %475 = vmatpush1.msra.mxu0 %v432
    %476 = vmatprep.subr.mxu0 0.0
    %477 = vmatpush1.msra.mxu0 %v433
    %478 = vmatprep.subr.mxu0 0.0
    %479 = vmatpush1.msra.mxu0 %v434
    %480 = vmatprep.subr.mxu0 0.0
    %481 = vmatpush1.msra.mxu0 %v435
    %482 = vmatprep.subr.mxu0 0.0
    %483 = vmatpush1.msra.mxu0 %v436
    %484 = vmatprep.subr.mxu0 0.0
    %485 = vmatpush1.msra.mxu0 %v437
    %486 = vmatprep.subr.mxu0 0.0
    %487 = vmatpush1.msra.mxu0 %v438
    %488 = vmatprep.subr.mxu0 0.0
    %489 = vmatpush1.msra.mxu0 %v439
    %490 = vmatprep.subr.mxu0 0.0
    %491 = vmatpush1.msra.mxu0 %v440
    %492 = vmatprep.subr.mxu0 0.0
    %493 = vmatpush1.msra.mxu0 %v441
    %494 = vmatprep.subr.mxu0 0.0
    %495 = vmatpush1.msra.mxu0 %v442
    %496 = vmatprep.subr.mxu0 0.0
    %497 = vmatpush1.msra.mxu0 %v443
    %498 = vmatprep.subr.mxu0 0.0
    %499 = vmatpush1.msra.mxu0 %v444
    %500 = vmatprep.subr.mxu0 0.0
    %501 = vmatpush1.msra.mxu0 %v445
    %502 = vmatprep.subr.mxu0 0.0
    %503 = vmatpush1.msra.mxu0 %v446
    %504 = vmatprep.subr.mxu0 0.0
    %505 = vmatpush1.msra.mxu0 %v447
    %506 = vmatprep.subr.mxu0 0.0
    %507 = vmatpush1.msra.mxu0 %v448
    %508 = vmatprep.subr.mxu0 0.0
    %509 = vmatpush1.msra.mxu0 %v449
    %510 = vmatprep.subr.mxu0 0.0
    %511 = vmatpush1.msra.mxu0 %v450
    %512 = vmatprep.subr.mxu0 0.0
    %513 = vmatpush1.msra.mxu0 %v451
    %514 = vmatprep.subr.mxu0 0.0
    %515 = vmatpush1.msra.mxu0 %v452
    %516 = vmatprep.subr.mxu0 0.0
    %517 = vmatpush1.msra.mxu0 %v453
    %518 = vmatprep.subr.mxu0 0.0
    %519 = vmatpush1.msra.mxu0 %v454
    %520 = vmatprep.subr.mxu0 0.0
    %521 = vmatpush1.msra.mxu0 %v455
    %522 = vmatprep.subr.mxu0 0.0
    %523 = vmatpush1.msra.mxu0 %v456
    %524 = vmatprep.subr.mxu0 0.0
    %525 = vmatpush1.msra.mxu0 %v457
    %526 = vmatprep.subr.mxu0 0.0
    %527 = vmatpush1.msra.mxu0 %v458
    %528 = vmatprep.subr.mxu0 0.0
    %529 = vmatpush1.msra.mxu0 %v459
    %530 = vmatprep.subr.mxu0 0.0
    %531 = vmatpush1.msra.mxu0 %v460
    %532 = vmatprep.mubr.f32.mxu0 %v424
    %533 = vmatmul.mubr.f32.gmra.mrb[0].mxu0 %v423
    %v534 = vpop.f32.mrb[0].mxu0
    %v535 = vadd.f32 %v466, %v534
    %v536 = vpop.f32.mrb[0].mxu0
    %537 = vmatprep.mubr.f32.mxu0 %v426
    %538 = vmatmul.mubr.f32.gmra.mrb[0].mxu0 %v425
    %v539 = vpop.f32.mrb[0].mxu0
    %v540 = vadd.f32 %v466, %v539
    %v541 = vpop.f32.mrb[0].mxu0
    %542 = vmatprep.mubr.f32.mxu0 %v428
    %543 = vmatmul.mubr.f32.gmra.mrb[0].mxu0 %v427
    %v544 = vpop.f32.mrb[0].mxu0
    %v545 = vadd.f32 %v466, %v544
    %v546 = vpop.f32.mrb[0].mxu0
    %547 = vdwg.mxu0
    %v548 = vmax.f32 %v535, 0.0
    %v549 = vmax.f32 %v540, 0.0
    %v550 = vmax.f32 %v545, 0.0
    %vm551 = vcmask 523264
    %v552 = vsel %vm551, %v548, 0.0
    %v553 = vsel %vm551, %v549, 0.0
    %v554 = vadd.f32 %v552, %v553
    %v555 = vsel %vm551, %v550, 0.0
    %v556 = vadd.f32 %v554, %v555
    %v557 = vld [vmem:[#allocation14] sm:$0xff]
    %v558 = vld [vmem:[#allocation14 + $0x8] sm:$0xff]
    %v559 = vld [vmem:[#allocation14 + $0x10] sm:$0xff]
    %v560 = vld [vmem:[#allocation14 + $0x18] sm:$0xff]
    %v561 = vld [vmem:[#allocation14 + $0x20] sm:$0xff]
    %v562 = vld [vmem:[#allocation14 + $0x28] sm:$0xff]
    %v563 = vld [vmem:[#allocation14 + $0x30] sm:$0xff]
    %v564 = vld [vmem:[#allocation14 + $0x38] sm:$0xff]
    %v565 = vld [vmem:[#allocation14 + $0x40] sm:$0xff]
    %v566 = vld [vmem:[#allocation14 + $0x48] sm:$0xff]
    %v567 = vld [vmem:[#allocation14 + $0x50] sm:$0xff]
    %v568 = vld [vmem:[#allocation14 + $0x58] sm:$0xff]
    %v569 = vld [vmem:[#allocation14 + $0x60] sm:$0xff]
    %v570 = vld [vmem:[#allocation14 + $0x68] sm:$0xff]
    %v571 = vld [vmem:[#allocation14 + $0x70] sm:$0xff]
    %v572 = vld [vmem:[#allocation14 + $0x78] sm:$0xff]
    %v573 = vld [vmem:[#allocation16] sm:$0x3]
    %v575 = vlaneseq
    %v576 = vshrl.u32 %v575, 7
    %v577 = vsub.s32 0, %v576
    %v578 = vrot.slane %v573, %v577
    %v579 = vlaneseq
    %v580 = vshrl.u32 %v579, 7
    %v581 = vsub.s32 1, %v580
    %v582 = vrot.slane %v573, %v581
    %v586 = vsel %vm551, %v556, 0
    %588 = vmatprep.subr.mxu0 %v558
    %589 = vmatpush1.msra.mxu0 %v557
    %590 = vmatprep.subr.mxu0 %v560
    %591 = vmatpush1.msra.mxu0 %v559
    %592 = vmatprep.subr.mxu0 %v562
    %593 = vmatpush1.msra.mxu0 %v561
    %594 = vmatprep.subr.mxu0 %v564
    %595 = vmatpush1.msra.mxu0 %v563
    %596 = vmatprep.subr.mxu0 %v566
    %597 = vmatpush1.msra.mxu0 %v565
    %598 = vmatprep.subr.mxu0 %v568
    %599 = vmatpush1.msra.mxu0 %v567
    %600 = vmatprep.subr.mxu0 %v570
    %601 = vmatpush1.msra.mxu0 %v569
    %602 = vmatprep.subr.mxu0 %v572
    %603 = vmatpush1.msra.mxu0 %v571
    %604 = vmatprep.subr.mxu0 0.0
    %605 = vmatpush1.msra.mxu0 0.0
    %606 = vmatprep.subr.mxu0 0.0
    %607 = vmatpush1.msra.mxu0 0.0
    %608 = vmatprep.subr.mxu0 0.0
    %609 = vmatpush1.msra.mxu0 0.0
    %610 = vmatprep.subr.mxu0 0.0
    %611 = vmatpush1.msra.mxu0 0.0
    %612 = vmatprep.subr.mxu0 0.0
    %613 = vmatpush1.msra.mxu0 0.0
    %614 = vmatprep.subr.mxu0 0.0
    %615 = vmatpush1.msra.mxu0 0.0
    %616 = vmatprep.subr.mxu0 0.0
    %617 = vmatpush1.msra.mxu0 0.0
    %618 = vmatprep.subr.mxu0 0.0
    %619 = vmatpush1.msra.mxu0 0.0
    %620 = vmatprep.subr.mxu0 0.0
    %621 = vmatpush1.msra.mxu0 0.0
    %622 = vmatprep.subr.mxu0 0.0
    %623 = vmatpush1.msra.mxu0 0.0
    %624 = vmatprep.subr.mxu0 0.0
    %625 = vmatpush1.msra.mxu0 0.0
    %626 = vmatprep.subr.mxu0 0.0
    %627 = vmatpush1.msra.mxu0 0.0
    %628 = vmatprep.subr.mxu0 0.0
    %629 = vmatpush1.msra.mxu0 0.0
    %630 = vmatprep.subr.mxu0 0.0
    %631 = vmatpush1.msra.mxu0 0.0
    %632 = vmatprep.subr.mxu0 0.0
    %633 = vmatpush1.msra.mxu0 0.0
    %634 = vmatprep.subr.mxu0 0.0
    %635 = vmatpush1.msra.mxu0 0.0
    %636 = vmatprep.subr.mxu0 0.0
    %637 = vmatpush1.msra.mxu0 0.0
    %638 = vmatprep.subr.mxu0 0.0
    %639 = vmatpush1.msra.mxu0 0.0
    %640 = vmatprep.subr.mxu0 0.0
    %641 = vmatpush1.msra.mxu0 0.0
    %642 = vmatprep.subr.mxu0 0.0
    %643 = vmatpush1.msra.mxu0 0.0
    %644 = vmatprep.subr.mxu0 0.0
    %645 = vmatpush1.msra.mxu0 0.0
    %646 = vmatprep.subr.mxu0 0.0
    %647 = vmatpush1.msra.mxu0 0.0
    %648 = vmatprep.subr.mxu0 0.0
    %649 = vmatpush1.msra.mxu0 0.0
    %650 = vmatprep.subr.mxu0 0.0
    %651 = vmatpush1.msra.mxu0 0.0
    %652 = vmatprep.mubr.f32.mxu0 0.0
    %653 = vmatmul.mubr.f32.gmra.mrb[0].mxu0 %v586
    %v654 = vpop.f32.mrb[0].mxu0
    %v655 = vadd.f32 %v578, %v654
    %v656 = vpop.f32.mrb[0].mxu0
    %v657 = vadd.f32 %v582, %v656
    %658 = vdwg.mxu0
    %v659 = vmax.f32 %v655, 0.0
    %v660 = vmax.f32 %v657, 0.0
    %v661 = vld [vmem:[#allocation17] sm:$0xff]
    %v662 = vld [vmem:[#allocation17 + $0x8] sm:$0xff]
    %v663 = vld [vmem:[#allocation17 + $0x10] sm:$0xff]
    %v664 = vld [vmem:[#allocation17 + $0x18] sm:$0xff]
    %v665 = vld [vmem:[#allocation17 + $0x20] sm:$0xff]
    %v666 = vld [vmem:[#allocation17 + $0x28] sm:$0xff]
    %v667 = vld [vmem:[#allocation17 + $0x30] sm:$0xff]
    %v668 = vld [vmem:[#allocation17 + $0x38] sm:$0xff]
    %v669 = vld [vmem:[#allocation17 + $0x40] sm:$0xff]
    %v670 = vld [vmem:[#allocation17 + $0x48] sm:$0xff]
    %v671 = vld [vmem:[#allocation17 + $0x50] sm:$0xff]
    %v672 = vld [vmem:[#allocation17 + $0x58] sm:$0xff]
    %v673 = vld [vmem:[#allocation17 + $0x60] sm:$0xff]
    %v674 = vld [vmem:[#allocation17 + $0x68] sm:$0xff]
    %v675 = vld [vmem:[#allocation17 + $0x70] sm:$0xff]
    %v676 = vld [vmem:[#allocation17 + $0x78] sm:$0xff]
    %v677 = vld [vmem:[#allocation17 + $0x80] sm:$0xff]
    %v678 = vld [vmem:[#allocation17 + $0x88] sm:$0xff]
    %v679 = vld [vmem:[#allocation17 + $0x90] sm:$0xff]
    %v680 = vld [vmem:[#allocation17 + $0x98] sm:$0xff]
    %v681 = vld [vmem:[#allocation17 + $0xa0] sm:$0xff]
    %v682 = vld [vmem:[#allocation17 + $0xa8] sm:$0xff]
    %v683 = vld [vmem:[#allocation17 + $0xb0] sm:$0xff]
    %v684 = vld [vmem:[#allocation17 + $0xb8] sm:$0xff]
    %v685 = vld [vmem:[#allocation17 + $0xc0] sm:$0xff]
    %v686 = vld [vmem:[#allocation17 + $0xc8] sm:$0xff]
    %v687 = vld [vmem:[#allocation17 + $0xd0] sm:$0xff]
    %v688 = vld [vmem:[#allocation17 + $0xd8] sm:$0xff]
    %v689 = vld [vmem:[#allocation17 + $0xe0] sm:$0xff]
    %v690 = vld [vmem:[#allocation17 + $0xe8] sm:$0xff]
    %v691 = vld [vmem:[#allocation17 + $0xf0] sm:$0xff]
    %v692 = vld [vmem:[#allocation17 + $0xf8] sm:$0xff]
    %v693 = vld [vmem:[#allocation17 + $0x100] sm:$0xff]
    %v694 = vld [vmem:[#allocation17 + $0x108] sm:$0xff]
    %v695 = vld [vmem:[#allocation17 + $0x110] sm:$0xff]
    %v696 = vld [vmem:[#allocation17 + $0x118] sm:$0xff]
    %v697 = vld [vmem:[#allocation17 + $0x120] sm:$0xff]
    %v698 = vld [vmem:[#allocation17 + $0x128] sm:$0xff]
    %v699 = vld [vmem:[#allocation17 + $0x130] sm:$0xff]
    %v700 = vld [vmem:[#allocation17 + $0x138] sm:$0xff]
    %v701 = vld [vmem:[#allocation17 + $0x140] sm:$0xff]
    %v702 = vld [vmem:[#allocation17 + $0x148] sm:$0xff]
    %v703 = vld [vmem:[#allocation17 + $0x150] sm:$0xff]
    %v704 = vld [vmem:[#allocation17 + $0x158] sm:$0xff]
    %v705 = vld [vmem:[#allocation17 + $0x160] sm:$0xff]
    %v706 = vld [vmem:[#allocation17 + $0x168] sm:$0xff]
    %v707 = vld [vmem:[#allocation17 + $0x170] sm:$0xff]
    %v708 = vld [vmem:[#allocation17 + $0x178] sm:$0xff]
    %v709 = vld [vmem:[#allocation17 + $0x180] sm:$0xff]
    %v710 = vld [vmem:[#allocation17 + $0x188] sm:$0xff]
    %v711 = vld [vmem:[#allocation17 + $0x190] sm:$0xff]
    %v712 = vld [vmem:[#allocation17 + $0x198] sm:$0xff]
    %v713 = vld [vmem:[#allocation17 + $0x1a0] sm:$0xff]
    %v714 = vld [vmem:[#allocation17 + $0x1a8] sm:$0xff]
    %v715 = vld [vmem:[#allocation17 + $0x1b0] sm:$0xff]
    %v716 = vld [vmem:[#allocation17 + $0x1b8] sm:$0xff]
    %v717 = vld [vmem:[#allocation17 + $0x1c0] sm:$0xff]
    %v718 = vld [vmem:[#allocation17 + $0x1c8] sm:$0xff]
    %v719 = vld [vmem:[#allocation17 + $0x1d0] sm:$0xff]
    %v720 = vld [vmem:[#allocation17 + $0x1d8] sm:$0xff]
    %v721 = vld [vmem:[#allocation17 + $0x1e0] sm:$0xff]
    %v722 = vld [vmem:[#allocation17 + $0x1e8] sm:$0xff]
    %v723 = vld [vmem:[#allocation17 + $0x1f0] sm:$0xff]
    %v724 = vld [vmem:[#allocation17 + $0x1f8] sm:$0xff]
    %v725 = vld [vmem:[#allocation19] sm:$0x3]
    %v727 = vlaneseq
    %v728 = vshrl.u32 %v727, 7
    %v729 = vsub.s32 0, %v728
    %v730 = vrot.slane %v725, %v729
    %v731 = vlaneseq
    %v732 = vshrl.u32 %v731, 7
    %v733 = vsub.s32 1, %v732
    %v734 = vrot.slane %v725, %v733
    %737 = vmatprep.subr.mxu0 %v662
    %738 = vmatpush1.msra.mxu0 %v661
    %739 = vmatprep.subr.mxu0 %v664
    %740 = vmatpush1.msra.mxu0 %v663
    %741 = vmatprep.subr.mxu0 %v666
    %742 = vmatpush1.msra.mxu0 %v665
    %743 = vmatprep.subr.mxu0 %v668
    %744 = vmatpush1.msra.mxu0 %v667
    %745 = vmatprep.subr.mxu0 %v670
    %746 = vmatpush1.msra.mxu0 %v669
    %747 = vmatprep.subr.mxu0 %v672
    %748 = vmatpush1.msra.mxu0 %v671
    %749 = vmatprep.subr.mxu0 %v674
    %750 = vmatpush1.msra.mxu0 %v673
    %751 = vmatprep.subr.mxu0 %v676
    %752 = vmatpush1.msra.mxu0 %v675
    %753 = vmatprep.subr.mxu0 %v678
    %754 = vmatpush1.msra.mxu0 %v677
    %755 = vmatprep.subr.mxu0 %v680
    %756 = vmatpush1.msra.mxu0 %v679
    %757 = vmatprep.subr.mxu0 %v682
    %758 = vmatpush1.msra.mxu0 %v681
    %759 = vmatprep.subr.mxu0 %v684
    %760 = vmatpush1.msra.mxu0 %v683
    %761 = vmatprep.subr.mxu0 %v686
    %762 = vmatpush1.msra.mxu0 %v685
    %763 = vmatprep.subr.mxu0 %v688
    %764 = vmatpush1.msra.mxu0 %v687
    %765 = vmatprep.subr.mxu0 %v690
    %766 = vmatpush1.msra.mxu0 %v689
    %767 = vmatprep.subr.mxu0 %v692
    %768 = vmatpush1.msra.mxu0 %v691
    %769 = vmatprep.subr.mxu0 %v694
    %770 = vmatpush1.msra.mxu0 %v693
    %771 = vmatprep.subr.mxu0 %v696
    %772 = vmatpush1.msra.mxu0 %v695
    %773 = vmatprep.subr.mxu0 %v698
    %774 = vmatpush1.msra.mxu0 %v697
    %775 = vmatprep.subr.mxu0 %v700
    %776 = vmatpush1.msra.mxu0 %v699
    %777 = vmatprep.subr.mxu0 %v702
    %778 = vmatpush1.msra.mxu0 %v701
    %779 = vmatprep.subr.mxu0 %v704
    %780 = vmatpush1.msra.mxu0 %v703
    %781 = vmatprep.subr.mxu0 %v706
    %782 = vmatpush1.msra.mxu0 %v705
    %783 = vmatprep.subr.mxu0 %v708
    %784 = vmatpush1.msra.mxu0 %v707
    %785 = vmatprep.subr.mxu0 %v710
    %786 = vmatpush1.msra.mxu0 %v709
    %787 = vmatprep.subr.mxu0 %v712
    %788 = vmatpush1.msra.mxu0 %v711
    %789 = vmatprep.subr.mxu0 %v714
    %790 = vmatpush1.msra.mxu0 %v713
    %791 = vmatprep.subr.mxu0 %v716
    %792 = vmatpush1.msra.mxu0 %v715
    %793 = vmatprep.subr.mxu0 %v718
    %794 = vmatpush1.msra.mxu0 %v717
    %795 = vmatprep.subr.mxu0 %v720
    %796 = vmatpush1.msra.mxu0 %v719
    %797 = vmatprep.subr.mxu0 %v722
    %798 = vmatpush1.msra.mxu0 %v721
    %799 = vmatprep.subr.mxu0 %v724
    %800 = vmatpush1.msra.mxu0 %v723
    %801 = vmatprep.mubr.f32.mxu0 %v660
    %802 = vmatmul.mubr.f32.gmra.mrb[0].mxu0 %v659
    %v803 = vpop.f32.mrb[0].mxu0
    %v804 = vadd.f32 %v730, %v803
    %v805 = vpop.f32.mrb[0].mxu0
    %v806 = vadd.f32 %v734, %v805
    %807 = vdwg.mxu0
    %v808 = vmax.f32 %v804, 0.0
    %v809 = vmax.f32 %v806, 0.0
    %v810 = vld [vmem:[#allocation20] sm:$0xff]
    %v811 = vld [vmem:[#allocation20 + $0x8] sm:$0xff]
    %v812 = vld [vmem:[#allocation20 + $0x10] sm:$0xff]
    %v813 = vld [vmem:[#allocation20 + $0x18] sm:$0xff]
    %v814 = vld [vmem:[#allocation20 + $0x20] sm:$0xff]
    %v815 = vld [vmem:[#allocation20 + $0x28] sm:$0xff]
    %v816 = vld [vmem:[#allocation20 + $0x30] sm:$0xff]
    %v817 = vld [vmem:[#allocation20 + $0x38] sm:$0xff]
    %v818 = vld [vmem:[#allocation20 + $0x40] sm:$0xff]
    %v819 = vld [vmem:[#allocation20 + $0x48] sm:$0xff]
    %v820 = vld [vmem:[#allocation20 + $0x50] sm:$0xff]
    %v821 = vld [vmem:[#allocation20 + $0x58] sm:$0xff]
    %v822 = vld [vmem:[#allocation20 + $0x60] sm:$0xff]
    %v823 = vld [vmem:[#allocation20 + $0x68] sm:$0xff]
    %v824 = vld [vmem:[#allocation20 + $0x70] sm:$0xff]
    %v825 = vld [vmem:[#allocation20 + $0x78] sm:$0xff]
    %v826 = vld [vmem:[#allocation20 + $0x80] sm:$0xff]
    %v827 = vld [vmem:[#allocation20 + $0x88] sm:$0xff]
    %v828 = vld [vmem:[#allocation20 + $0x90] sm:$0xff]
    %v829 = vld [vmem:[#allocation20 + $0x98] sm:$0xff]
    %v830 = vld [vmem:[#allocation20 + $0xa0] sm:$0xff]
    %v831 = vld [vmem:[#allocation20 + $0xa8] sm:$0xff]
    %v832 = vld [vmem:[#allocation20 + $0xb0] sm:$0xff]
    %v833 = vld [vmem:[#allocation20 + $0xb8] sm:$0xff]
    %v834 = vld [vmem:[#allocation20 + $0xc0] sm:$0xff]
    %v835 = vld [vmem:[#allocation20 + $0xc8] sm:$0xff]
    %v836 = vld [vmem:[#allocation20 + $0xd0] sm:$0xff]
    %v837 = vld [vmem:[#allocation20 + $0xd8] sm:$0xff]
    %v838 = vld [vmem:[#allocation20 + $0xe0] sm:$0xff]
    %v839 = vld [vmem:[#allocation20 + $0xe8] sm:$0xff]
    %v840 = vld [vmem:[#allocation20 + $0xf0] sm:$0xff]
    %v841 = vld [vmem:[#allocation20 + $0xf8] sm:$0xff]
    %v842 = vld [vmem:[#allocation22] sm:$0x1]
    %v844 = vlaneseq
    %v845 = vshrl.u32 %v844, 7
    %v846 = vsub.s32 0, %v845
    %v847 = vrot.slane %v842, %v846
    %849 = vmatprep.subr.mxu0 0.0
    %850 = vmatpush1.msra.mxu0 %v810
    %851 = vmatprep.subr.mxu0 0.0
    %852 = vmatpush1.msra.mxu0 %v811
    %853 = vmatprep.subr.mxu0 0.0
    %854 = vmatpush1.msra.mxu0 %v812
    %855 = vmatprep.subr.mxu0 0.0
    %856 = vmatpush1.msra.mxu0 %v813
    %857 = vmatprep.subr.mxu0 0.0
    %858 = vmatpush1.msra.mxu0 %v814
    %859 = vmatprep.subr.mxu0 0.0
    %860 = vmatpush1.msra.mxu0 %v815
    %861 = vmatprep.subr.mxu0 0.0
    %862 = vmatpush1.msra.mxu0 %v816
    %863 = vmatprep.subr.mxu0 0.0
    %864 = vmatpush1.msra.mxu0 %v817
    %865 = vmatprep.subr.mxu0 0.0
    %866 = vmatpush1.msra.mxu0 %v818
    %867 = vmatprep.subr.mxu0 0.0
    %868 = vmatpush1.msra.mxu0 %v819
    %869 = vmatprep.subr.mxu0 0.0
    %870 = vmatpush1.msra.mxu0 %v820
    %871 = vmatprep.subr.mxu0 0.0
    %872 = vmatpush1.msra.mxu0 %v821
    %873 = vmatprep.subr.mxu0 0.0
    %874 = vmatpush1.msra.mxu0 %v822
    %875 = vmatprep.subr.mxu0 0.0
    %876 = vmatpush1.msra.mxu0 %v823
    %877 = vmatprep.subr.mxu0 0.0
    %878 = vmatpush1.msra.mxu0 %v824
    %879 = vmatprep.subr.mxu0 0.0
    %880 = vmatpush1.msra.mxu0 %v825
    %881 = vmatprep.subr.mxu0 0.0
    %882 = vmatpush1.msra.mxu0 %v826
    %883 = vmatprep.subr.mxu0 0.0
    %884 = vmatpush1.msra.mxu0 %v827
    %885 = vmatprep.subr.mxu0 0.0
    %886 = vmatpush1.msra.mxu0 %v828
    %887 = vmatprep.subr.mxu0 0.0
    %888 = vmatpush1.msra.mxu0 %v829
    %889 = vmatprep.subr.mxu0 0.0
    %890 = vmatpush1.msra.mxu0 %v830
    %891 = vmatprep.subr.mxu0 0.0
    %892 = vmatpush1.msra.mxu0 %v831
    %893 = vmatprep.subr.mxu0 0.0
    %894 = vmatpush1.msra.mxu0 %v832
    %895 = vmatprep.subr.mxu0 0.0
    %896 = vmatpush1.msra.mxu0 %v833
    %897 = vmatprep.subr.mxu0 0.0
    %898 = vmatpush1.msra.mxu0 %v834
    %899 = vmatprep.subr.mxu0 0.0
    %900 = vmatpush1.msra.mxu0 %v835
    %901 = vmatprep.subr.mxu0 0.0
    %902 = vmatpush1.msra.mxu0 %v836
    %903 = vmatprep.subr.mxu0 0.0
    %904 = vmatpush1.msra.mxu0 %v837
    %905 = vmatprep.subr.mxu0 0.0
    %906 = vmatpush1.msra.mxu0 %v838
    %907 = vmatprep.subr.mxu0 0.0
    %908 = vmatpush1.msra.mxu0 %v839
    %909 = vmatprep.subr.mxu0 0.0
    %910 = vmatpush1.msra.mxu0 %v840
    %911 = vmatprep.subr.mxu0 0.0
    %912 = vmatpush1.msra.mxu0 %v841
    %913 = vmatprep.mubr.f32.mxu0 %v809
    %914 = vmatmul.mubr.f32.gmra.mrb[0].mxu0 %v808
    %v915 = vpop.f32.mrb[0].mxu0
    %v916 = vadd.f32 %v847, %v915
    %v917 = vpop.f32.mrb[0].mxu0
    %918 = vdwg.mxu0
    %v919 = vlaneseq
    %v920 = vand.u32 %v919, 127
    %v921 = vmax.f32 %v916, -20.0
    %v922 = vmin.f32 %v921, 2.0
    %vm923 = vcmp.ge.s32.totalorder %v920, 4
    %v924 = vsel %vm923, %v922, %v916
    %vm925 = vcmask 64512
    %926 = vst.msk [vmem:[#allocation23] sm:$0xff] %vm925, %v924
    // Predicated region
    $region106: #{tpu_custom_call.1} parent=1 // pred_check
      _
    $region107: #{tpu_custom_call.1} parent=1 // pred_check_branch
      %928 = sbr.rel (0) target = $region109
    $region108: #{tpu_custom_call.1} parent=1 // pred_region
      %s930 = ssub.s32 128, 128
      %931 = vsyncadd [#allocation4], %s930
      %s933 = sshll.u32 [#allocation23], 4
      %s934 = int_to_ptr.vmem [resolvable:$true] %s933
      %936 = dma.vmem_to_hbm [thread:$0]  %s934, 128, %s13, [#allocation4]
    $region109: #{tpu_custom_call.1} parent=1 // pred_fallthru
      _
    // Predicated region
    $region110: #{tpu_custom_call.1} parent=1 // pred_check
      _
    $region111: #{tpu_custom_call.1} parent=1 // pred_check_branch
      %938 = sbr.rel (0) target = $region113
    $region112: #{tpu_custom_call.1} parent=1 // pred_region
      %939 = dma.done [#allocation4], 128
    $region113: #{tpu_custom_call.1} parent=1 // pred_fallthru
      _
    %940 = vsyncpa [#allocation3], 1
    %941 = vsyncpa [#allocation6], 1
    %942 = vsyncpa [#allocation9], 1
    %943 = vsyncpa [#allocation12], 1
    %944 = vsyncpa [#allocation15], 1
    %945 = vsyncpa [#allocation18], 1
    %946 = vsyncpa [#allocation21], 1
    %947 = vsyncpa [#allocation4], 1

</llo_original>
